<compile_context>
chip_gen: v7x
topology: tpu7x:2x2x1
jax: 0.10.0
libtpu: 0.0.40
codegen_flags: <defaults>
</compile_context>

<pallas_src>
import jax
import jax.numpy as jnp
from jax.experimental import pallas as pl
from jax.experimental.pallas import tpu as pltpu


def _round_up(x: int, m: int) -> int:
    return ((x + m - 1) // m) * m


def _min_sublane(dtype) -> int:
    """Minimum second-to-last block dim for a dtype (8 x sublane packing)."""
    return 8 * max(1, 4 // jnp.dtype(dtype).itemsize)


def _pick_tile(dim: int, candidates, align: int, max_waste: float = 0.125) -> int:
    """Largest tile from `candidates` whose padding waste on `dim` is bounded."""
    d = _round_up(max(dim, 1), align)
    for t in candidates:
        if t < align or t > d:
            continue
        if _round_up(d, t) - d <= max_waste * d:
            return t
    return align


def _linear_kernel_acc(x_ref, w_ref, b_ref, o_ref, acc_ref):
    """y = x @ w + b with an f32 VMEM accumulator (bf16 / low-precision out)."""
    k = pl.program_id(2)

    @pl.when(k == 0)
    def _init():
        # Bias added exactly once, in f32, by seeding the accumulator.
        acc_ref[...] = jnp.broadcast_to(
            b_ref[...].astype(jnp.float32), acc_ref.shape
        )

    acc_ref[...] += jnp.dot(
        x_ref[...], w_ref[...], preferred_element_type=jnp.float32
    )

    @pl.when(k == pl.num_programs(2) - 1)
    def _finalize():
        o_ref[...] = acc_ref[...].astype(o_ref.dtype)


def _linear_kernel_f32out(x_ref, w_ref, b_ref, o_ref):
    """f32 output: accumulate directly into the resident output block."""
    k = pl.program_id(2)

    @pl.when(k == 0)
    def _init():
        o_ref[...] = jnp.broadcast_to(b_ref[...].astype(jnp.float32), o_ref.shape)

    o_ref[...] += jnp.dot(x_ref[...], w_ref[...], preferred_element_type=jnp.float32)


def pallas_linear(x2d, w_pad, b_pad, n_out, *, tn, tk):
    """Tiled linear: x2d [M,K] @ w_pad [Kp,Np] + b_pad [1,Np] -> [M, n_out].

    w_pad / b_pad are already zero-padded (once, at module init) to multiples
    of (tk, tn); only the activations are padded per call.  Zero padding of
    K rows / N columns is exact (padded N columns are sliced off below).
    """
    M, K = x2d.shape
    Kp, Np = w_pad.shape
    assert b_pad.shape == (1, Np) and K <= Kp and n_out <= Np
    assert Kp % tk == 0 and Np % tn == 0

    sub = _min_sublane(x2d.dtype)
    # Bounded-waste M tile (avoids near-2x over-padding of a fixed tm).
    tm = _pick_tile(M, (512, 256, 128, 64, 32, 16, 8), sub)
    Mp = _round_up(M, tm)

    m_tiles, n_tiles, k_tiles = Mp // tm, Np // tn, Kp // tk

    # v7x megacore: keep both TensorCores busy — ensure at least one
    # "parallel" grid axis has >= 2 blocks when the problem allows it.
    if m_tiles * n_tiles == 1:
        if Np >= 256 and (Np // 2) % 128 == 0:
            tn = Np // 2
            n_tiles = 2
        elif Mp % (2 * sub) == 0:
            tm = Mp // 2
            m_tiles = 2

    # Per-call padding of the activations only.
    if (Mp, Kp) != (M, K):
        x2d = jnp.pad(x2d, ((0, Mp - M), (0, Kp - K)))

    out_dtype = x2d.dtype
    use_scratch = out_dtype != jnp.float32
    kernel = _linear_kernel_acc if use_scratch else _linear_kernel_f32out
    scratch = [pltpu.VMEM((tm, tn), jnp.float32)] if use_scratch else []

    xb = jnp.dtype(x2d.dtype).itemsize
    wb = jnp.dtype(w_pad.dtype).itemsize
    bb = jnp.dtype(b_pad.dtype).itemsize
    ob = jnp.dtype(out_dtype).itemsize

    # Real resident footprint: double-buffered inputs/outputs (+ accumulator).
    tile_bytes = (
        2 * (tm * tk * xb + tk * tn * wb + tn * bb)
        + 2 * tm * tn * ob
        + (tm * tn * 4 if use_scratch else 0)
    )
    # Headroom for compiler-internal scratch; cap well below v7x's 64 MiB
    # per-TC VMEM (v5e/v6e have 128 MiB, so the cap is safe everywhere).
    vmem_limit = int(min(max(tile_bytes + (4 << 20), 16 << 20), 40 << 20))

    # Bytes as actually streamed: W re-read per M tile, x re-read per N tile.
    cost = pl.CostEstimate(
        flops=2 * Mp * Kp * Np,
        transcendentals=0,
        bytes_accessed=(
            n_tiles * Mp * Kp * xb
            + m_tiles * Kp * Np * wb
            + Np * bb
            + Mp * Np * ob
        ),
    )

    out = pl.pallas_call(
        kernel,
        out_shape=jax.ShapeDtypeStruct((Mp, Np), out_dtype),
        grid_spec=pltpu.PrefetchScalarGridSpec(
            num_scalar_prefetch=0,
            grid=(m_tiles, n_tiles, k_tiles),
            in_specs=[
                pl.BlockSpec((tm, tk), lambda i, j, k: (i, k)),
                pl.BlockSpec((tk, tn), lambda i, j, k: (k, j)),
                pl.BlockSpec((1, tn), lambda i, j, k: (0, j)),
            ],
            out_specs=pl.BlockSpec((tm, tn), lambda i, j, k: (i, j)),
            scratch_shapes=scratch,
        ),
        compiler_params=pltpu.CompilerParams(
            dimension_semantics=("parallel", "parallel", "arbitrary"),
            vmem_limit_bytes=vmem_limit,
        ),
        cost_estimate=cost,
    )(x2d, w_pad, b_pad)

    if (Mp, Np) != (M, n_out):
        out = out[:M, :n_out]
    return out


class RemoteModulePallas:
    """JAX/Pallas analogue of concrete-ml's RemoteModule (local-exec modes).

    Reproduces the locally-executable forward semantics:
      - CALIBRATE mode: record the input into calibration_data, then run the
        wrapped private module (a linear layer -> Pallas matmul kernel).
      - TORCH mode: run the private module.
    """

    def __init__(
        self,
        d_in: int,
        d_out: int,
        verbose: int = 0,
        force_pallas: bool = False,
        compute_dtype=jnp.bfloat16,
    ):
        self.d_in, self.d_out = d_in, d_out
        # Bounded-waste N / K tiles, chosen once (the weight shape is static).
        self.tn = _pick_tile(d_out, (512, 256, 128), 128)
        self.tk = _pick_tile(d_in, (2048, 1024, 512, 256, 128), 128)

        key_w, key_b = jax.random.split(jax.random.PRNGKey(42))
        bound = 1.0 / (d_in ** 0.5)
        # Deterministic "private module" parameters, nn.Linear-like init.
        # Weight stored already transposed to [D_in, D_out], in bf16 by
        # default (MXU bf16 rate >> f32 on v6e/v7x; accumulation stays f32).
        w = jax.random.uniform(key_w, (d_in, d_out), jnp.float32, -bound, bound)
        b = jax.random.uniform(key_b, (1, d_out), jnp.float32, -bound, bound)

        Kp = _round_up(d_in, self.tk)
        Np = _round_up(d_out, self.tn)
        # Pad the weight / bias ONCE here, not per forward call.
        self.weight_t_padded = jnp.pad(
            w.astype(compute_dtype), ((0, Kp - d_in), (0, Np - d_out))
        )
        # Bias kept in f32 (tiny) and added in f32 inside the kernel.
        self.bias_padded = jnp.pad(b, ((0, 0), (0, Np - d_out)))

        self.calibration_data = []  # unbounded host-side growth, mirrors the reference impl
        self.fhe_local_mode = "calibrate"  # {"calibrate", "torch"}
        self.verbose = verbose
        self.progress_callback = None
        self.force_pallas = force_pallas
        self.compute_dtype = compute_dtype
        # TODO(synk): REMOTE mode / init_fhe_client / remote_call / private_q_module
        # are FHE client-server + network glue with no Pallas equivalent.
        # TODO(synk): int8 (v5e/v6e) / fp8 (v7x) quantized-weight MXU paths for
        # concrete-ml quantized modules are not implemented here.

    def forward(self, x: jax.Array) -> jax.Array:
        if self.fhe_local_mode == "calibrate":
            self.calibration_data.append(x)
        elif self.fhe_local_mode != "torch":
            raise ValueError(f"{self.fhe_local_mode} is not supported here")

        B, S, d_in = x.shape
        assert d_in == self.d_in
        x2d = x.reshape(B * S, d_in).astype(self.compute_dtype)

        # Tiny problems: launch + padding overhead dominates a Pallas call;
        # XLA's fused dot is strictly faster there (demo forces Pallas path).
        flops = 2 * (B * S) * d_in * self.d_out
        if self.force_pallas or flops >= (1 << 22):
            y2d = pallas_linear(
                x2d,
                self.weight_t_padded,
                self.bias_padded,
                self.d_out,
                tn=self.tn,
                tk=self.tk,
            )
        else:
            w = self.weight_t_padded[:d_in, : self.d_out]
            b = self.bias_padded[:, : self.d_out]
            y2d = (
                jnp.dot(x2d, w, preferred_element_type=jnp.float32) + b
            ).astype(x2d.dtype)

        y = y2d.reshape(B, S, self.d_out)
        if self.progress_callback is not None:
            self.progress_callback()
        return y

    def __call__(self, x):
        return self.forward(x)


if __name__ == "__main__":
    # Small shapes consistent with a hybrid-model linear remote module:
    # batch=2, seq=8, hidden=32 -> out=32.
    B, S, D_IN, D_OUT = 2, 8, 32, 32
    key = jax.random.PRNGKey(0)
    x = jax.random.normal(key, (B, S, D_IN), dtype=jnp.float32)

    # bf16 compute (default), forced Pallas path, CALIBRATE mode.
    module = RemoteModulePallas(D_IN, D_OUT, force_pallas=True)
    y = jax.block_until_ready(module(x))

    # Reference: same bf16 operands, f32 accumulation, same final cast.
    w_ref = module.weight_t_padded[:D_IN, :D_OUT]
    b_ref = module.bias_padded[:, :D_OUT]
    x2d = x.reshape(-1, D_IN).astype(module.compute_dtype)
    y_ref = (
        jnp.dot(x2d, w_ref, preferred_element_type=jnp.float32) + b_ref
    ).astype(module.compute_dtype).reshape(B, S, D_OUT)

    assert y.shape == (B, S, D_OUT)
    assert y.dtype == module.compute_dtype
    assert jnp.allclose(
        y.astype(jnp.float32), y_ref.astype(jnp.float32), atol=3e-2, rtol=3e-2
    )
    assert len(module.calibration_data) == 1  # CALIBRATE-mode bookkeeping

    # Also exercise the f32 (no-scratch, accumulate-into-output) kernel path.
    module_f32 = RemoteModulePallas(
        D_IN, D_OUT, force_pallas=True, compute_dtype=jnp.float32
    )
    module_f32.fhe_local_mode = "torch"
    y32 = jax.block_until_ready(module_f32(x))
    y32_ref = (
        x.reshape(-1, D_IN) @ module_f32.weight_t_padded[:D_IN, :D_OUT]
        + module_f32.bias_padded[:, :D_OUT]
    ).reshape(B, S, D_OUT)
    assert jnp.allclose(y32, y32_ref, atol=1e-4, rtol=1e-4)

    print("KERNEL_OK")
</pallas_src>

<mosaic_0001>
module attributes {stable_mosaic.version = 11 : i64} {
  func.func @_linear_kernel_acc(%arg0: i32, %arg1: i32, %arg2: i32, %arg3: memref<16x128xbf16, #tpu.memory_space<vmem>>, %arg4: memref<128x128xbf16, #tpu.memory_space<vmem>>, %arg5: memref<1x128xf32, #tpu.memory_space<vmem>>, %arg6: memref<16x128xbf16, #tpu.memory_space<vmem>>, %arg7: memref<16x128xf32, #tpu.memory_space<vmem>>) attributes {dimension_semantics = [#tpu.dimension_semantics<parallel>, #tpu.dimension_semantics<parallel>, #tpu.dimension_semantics<arbitrary>], iteration_bounds = array<i64: 1, 1, 1>, scalar_prefetch = 0 : i64, scratch_operands = 1 : i64, tpu.core_type = #tpu.core_type<tc>, window_params = [{transform_indices = @transform_0, window_bounds = array<i64: 16, 128>}, {transform_indices = @transform_1, window_bounds = array<i64: 128, 128>}, {transform_indices = @transform_2, window_bounds = array<i64: 1, 128>}, {transform_indices = @transform_3, window_bounds = array<i64: 16, 128>}]} {
    %c0_i32 = arith.constant 0 : i32
    %0 = arith.cmpi eq, %arg2, %c0_i32 : i32
    %1 = arith.extui %0 : i1 to i32
    %c0_i32_0 = arith.constant 0 : i32
    %2 = arith.cmpi ne, %1, %c0_i32_0 : i32
    scf.if %2 {
      %c0_10 = arith.constant 0 : index
      %c0_11 = arith.constant 0 : index
      %12 = vector.load %arg5[%c0_10, %c0_11] : memref<1x128xf32, #tpu.memory_space<vmem>>, vector<1x128xf32>
      %13 = vector.shape_cast %12 : vector<1x128xf32> to vector<1x128xf32>
      %14 = vector.broadcast %13 : vector<1x128xf32> to vector<16x128xf32>
      %c0_12 = arith.constant 0 : index
      %c0_13 = arith.constant 0 : index
      %15 = vector.load %arg7[%c0_12, %c0_13] : memref<16x128xf32, #tpu.memory_space<vmem>>, vector<16x128xf32>
      tpu.vector_store %arg7[%c0_12, %c0_13], %14 {strides = array<i32>} : memref<16x128xf32, #tpu.memory_space<vmem>>, vector<16x128xf32>,
    } else {
    }
    %c0 = arith.constant 0 : index
    %c0_1 = arith.constant 0 : index
    %3 = vector.load %arg7[%c0, %c0_1] : memref<16x128xf32, #tpu.memory_space<vmem>>, vector<16x128xf32>
    %c0_2 = arith.constant 0 : index
    %c0_3 = arith.constant 0 : index
    %4 = vector.load %arg3[%c0_2, %c0_3] : memref<16x128xbf16, #tpu.memory_space<vmem>>, vector<16x128xbf16>
    %c0_4 = arith.constant 0 : index
    %c0_5 = arith.constant 0 : index
    %5 = vector.load %arg4[%c0_4, %c0_5] : memref<128x128xbf16, #tpu.memory_space<vmem>>, vector<128x128xbf16>
    %cst = arith.constant dense<0.000000e+00> : vector<16x128xf32>
    %6 = tpu.matmul %4, %5, %cst {dimension_numbers = #tpu.dot_dimension_numbers<[1], [0], [0], [1], [0, 0, 1, 1], [], []>} : vector<16x128xbf16>, vector<128x128xbf16>, vector<16x128xf32> -> vector<16x128xf32>
    %7 = arith.addf %3, %6 : vector<16x128xf32>
    %c0_6 = arith.constant 0 : index
    %c0_7 = arith.constant 0 : index
    %8 = vector.load %arg7[%c0_6, %c0_7] : memref<16x128xf32, #tpu.memory_space<vmem>>, vector<16x128xf32>
    tpu.vector_store %arg7[%c0_6, %c0_7], %7 {strides = array<i32>} : memref<16x128xf32, #tpu.memory_space<vmem>>, vector<16x128xf32>,
    %c0_i32_8 = arith.constant 0 : i32
    %9 = arith.cmpi eq, %arg2, %c0_i32_8 : i32
    %10 = arith.extui %9 : i1 to i32
    %c0_i32_9 = arith.constant 0 : i32
    %11 = arith.cmpi ne, %10, %c0_i32_9 : i32
    scf.if %11 {
      %c0_10 = arith.constant 0 : index
      %c0_11 = arith.constant 0 : index
      %12 = vector.load %arg7[%c0_10, %c0_11] : memref<16x128xf32, #tpu.memory_space<vmem>>, vector<16x128xf32>
      %13 = arith.truncf %12 : vector<16x128xf32> to vector<16x128xbf16>
      %c0_12 = arith.constant 0 : index
      %c0_13 = arith.constant 0 : index
      %14 = vector.load %arg6[%c0_12, %c0_13] : memref<16x128xbf16, #tpu.memory_space<vmem>>, vector<16x128xbf16>
      tpu.vector_store %arg6[%c0_12, %c0_13], %13 {strides = array<i32>} : memref<16x128xbf16, #tpu.memory_space<vmem>>, vector<16x128xbf16>,
    } else {
    }
    return
  }
  func.func @transform_0(%arg0: i32, %arg1: i32, %arg2: i32) -> (i32, i32) {
    %c0_i32 = arith.constant 0 : i32
    return %arg0, %arg2 : i32, i32
  }
  func.func @transform_1(%arg0: i32, %arg1: i32, %arg2: i32) -> (i32, i32) {
    %c0_i32 = arith.constant 0 : i32
    return %arg2, %arg1 : i32, i32
  }
  func.func @transform_2(%arg0: i32, %arg1: i32, %arg2: i32) -> (i32, i32) {
    %c0_i32 = arith.constant 0 : i32
    %c0_i32_0 = arith.constant 0 : i32
    return %c0_i32, %arg1 : i32, i32
  }
  func.func @transform_3(%arg0: i32, %arg1: i32, %arg2: i32) -> (i32, i32) {
    %c0_i32 = arith.constant 0 : i32
    return %arg0, %arg1 : i32, i32
  }
}

</mosaic_0001>

<llo_original>
// kernel: tpu_custom_call.1
$region0: #{tpu_custom_call.1}
  #allocation0 [shape = 'u32[]', space=smem, size = 0x4, offset = 0x4, fixed_abs, tag = 'smem constant byte address 0x4 - core index']
  #allocation1 [shape = 'u32[144,128]{1,0:T(1,128)}', space=vmem, size = 0x12000, scoped, tag = 'internal scratch']
  #allocation2 [shape = 'f32[16,128]{1,0:T(8,128)}', space=vmem, size = 0x2000, scoped, tag = 'scratch operand']
  %s0 = inlined_call_operand.hbm [shape: bf16[16,128], index: 0, kind: input, shape index: {}]
  %s1 = inlined_call_operand.hbm [shape: bf16[128,128], index: 1, kind: input, shape index: {}]
  %s2 = inlined_call_operand.vmem [shape: f32[1,128], index: 2, kind: input, shape index: {}]
  %s3 = inlined_call_operand.hbm [shape: bf16[16,128], index: 3, kind: output, shape index: {}]
  %s4 = sld [smem:[#allocation0]]
  $region38: #{tpu_custom_call.1} parent=0
    _
  %s6 = ssub.s32 1, %s4
  %s7 = scalar_select 0, %s6, %s4
  $region1: #{tpu_custom_call.1} parent=0
    #allocation3 [shape = 'u8[4096]{0}', space=vmem, size = 0x1000, scoped, tag = 'input window, operand 0, single buffered']
    #allocation4 [shape = 's32[1]{0}', space=sflag, size = 0x4, scoped, tag = 'scoped memory for tpu_custom_call.1']
    #allocation5 [shape = 's32[1]{0}', space=sflag, size = 0x4, scoped, tag = 'scoped memory for tpu_custom_call.1']
    #allocation6 [shape = 'u8[32768]{0}', space=vmem, size = 0x8000, scoped, tag = 'input window, operand 1, single buffered']
    #allocation7 [shape = 's32[1]{0}', space=sflag, size = 0x4, scoped, tag = 'scoped memory for tpu_custom_call.1']
    #allocation8 [shape = 'u8[4096]{0}', space=vmem, size = 0x1000, scoped, tag = 'output window, operand 0, single buffered']
    %8 = vsyncpa [#allocation4], 0
    %9 = vsyncpa [#allocation7], 0
    %10 = vsyncpa [#allocation5], 0
    // Predicated region
    $region2: #{tpu_custom_call.1} parent=1 // pred_check
      _
    $region3: #{tpu_custom_call.1} parent=1 // pred_check_branch
      %12 = sbr.rel (0) target = $region5
    $region4: #{tpu_custom_call.1} parent=1 // pred_region
      %s14 = ssub.s32 128, 128
      %15 = vsyncadd [#allocation4], %s14
      %s16 = sshll.u32 [#allocation3], 4
      %s17 = int_to_ptr.vmem [resolvable:$true] %s16
      %22 = dma.hbm_to_vmem [thread:$0]  %s0, 128, %s17, [#allocation4], 64, 64, 4
    $region5: #{tpu_custom_call.1} parent=1 // pred_fallthru
      _
    // Predicated region
    $region6: #{tpu_custom_call.1} parent=1 // pred_check
      _
    $region7: #{tpu_custom_call.1} parent=1 // pred_check_branch
      %24 = sbr.rel (0) target = $region9
    $region8: #{tpu_custom_call.1} parent=1 // pred_region
      %s26 = ssub.s32 1024, 1024
      %27 = vsyncadd [#allocation7], %s26
      %s28 = sshll.u32 [#allocation6], 4
      %s29 = int_to_ptr.vmem [resolvable:$true] %s28
      %34 = dma.hbm_to_vmem [thread:$0]  %s1, 1024, %s29, [#allocation7], 64, 64, 4
    $region9: #{tpu_custom_call.1} parent=1 // pred_fallthru
      _
    // Predicated region
    $region10: #{tpu_custom_call.1} parent=1 // pred_check
      _
    $region11: #{tpu_custom_call.1} parent=1 // pred_check_branch
      %36 = sbr.rel (0) target = $region13
    $region12: #{tpu_custom_call.1} parent=1 // pred_region
      _
    $region13: #{tpu_custom_call.1} parent=1 // pred_fallthru
      _
    // Predicated region
    $region14: #{tpu_custom_call.1} parent=1 // pred_check
      _
    $region15: #{tpu_custom_call.1} parent=1 // pred_check_branch
      %38 = sbr.rel (0) target = $region17
    $region16: #{tpu_custom_call.1} parent=1 // pred_region
      %39 = dma.done [#allocation4], 128
    $region17: #{tpu_custom_call.1} parent=1 // pred_fallthru
      _
    // Predicated region
    $region18: #{tpu_custom_call.1} parent=1 // pred_check
      _
    $region19: #{tpu_custom_call.1} parent=1 // pred_check_branch
      %41 = sbr.rel (0) target = $region21
    $region20: #{tpu_custom_call.1} parent=1 // pred_region
      %42 = dma.done [#allocation7], 1024
    $region21: #{tpu_custom_call.1} parent=1 // pred_fallthru
      _
    %p44 = scmp.eq.s32.totalorder 0, 0
    // Predicated region
    $region22: #{tpu_custom_call.1} parent=1 // pred_check
      %p45 = pneg %p44
    $region23: #{tpu_custom_call.1} parent=1 // pred_check_branch
      %47 = sbr.rel (%p45) target = $region25
    $region24: #{tpu_custom_call.1} parent=1 // pred_region
      %v48 = vld [vmem:[%s2] sm:$0x1]
      %v50 = vlaneseq
      %v51 = vshrl.u32 %v50, 7
      %v52 = vsub.s32 0, %v51
      %v53 = vrot.slane %v48, %v52
      %55 = vst [vmem:[#allocation2] sm:$0xff] %v53
      %56 = vst [vmem:[#allocation2 + $0x8] sm:$0xff] %v53
    $region25: #{tpu_custom_call.1} parent=1 // pred_fallthru
      _
    %v57 = vld [vmem:[#allocation2] sm:$0xff]
    %v58 = vld [vmem:[#allocation2 + $0x8] sm:$0xff]
    %v59 = vld [vmem:[#allocation3] sm:$0xf]
    %v60 = vld [vmem:[#allocation3 + $0x4] sm:$0xf]
    %v61 = vld [vmem:[#allocation6] sm:$0xf]
    %v62 = vld [vmem:[#allocation6 + $0x4] sm:$0xf]
    %v63 = vld [vmem:[#allocation6 + $0x8] sm:$0xf]
    %v64 = vld [vmem:[#allocation6 + $0xc] sm:$0xf]
    %v65 = vld [vmem:[#allocation6 + $0x10] sm:$0xf]
    %v66 = vld [vmem:[#allocation6 + $0x14] sm:$0xf]
    %v67 = vld [vmem:[#allocation6 + $0x18] sm:$0xf]
    %v68 = vld [vmem:[#allocation6 + $0x1c] sm:$0xf]
    %v69 = vld [vmem:[#allocation6 + $0x20] sm:$0xf]
    %v70 = vld [vmem:[#allocation6 + $0x24] sm:$0xf]
    %v71 = vld [vmem:[#allocation6 + $0x28] sm:$0xf]
    %v72 = vld [vmem:[#allocation6 + $0x2c] sm:$0xf]
    %v73 = vld [vmem:[#allocation6 + $0x30] sm:$0xf]
    %v74 = vld [vmem:[#allocation6 + $0x34] sm:$0xf]
    %v75 = vld [vmem:[#allocation6 + $0x38] sm:$0xf]
    %v76 = vld [vmem:[#allocation6 + $0x3c] sm:$0xf]
    %v79 = vunpack.c.l.b16 %v59
    %v80 = vunpack.c.l.b16 %v60
    %v81 = vpack.c.b16 %v80, %v79
    %v99 = vunpack.c.l.b16 %v61
    %v100 = vunpack.c.l.b16 %v62
    %v101 = vunpack.c.l.b16 %v63
    %v102 = vunpack.c.l.b16 %v64
    %v103 = vunpack.c.l.b16 %v65
    %v104 = vunpack.c.l.b16 %v66
    %v105 = vunpack.c.l.b16 %v67
    %v106 = vunpack.c.l.b16 %v68
    %v107 = vunpack.c.l.b16 %v69
    %v108 = vunpack.c.l.b16 %v70
    %v109 = vunpack.c.l.b16 %v71
    %v110 = vunpack.c.l.b16 %v72
    %v111 = vunpack.c.l.b16 %v73
    %v112 = vunpack.c.l.b16 %v74
    %v113 = vunpack.c.l.b16 %v75
    %v114 = vunpack.c.l.b16 %v76
    %v115 = vpack.c.b16 %v100, %v99
    %v116 = vpack.c.b16 %v102, %v101
    %v117 = vpack.c.b16 %v104, %v103
    %v118 = vpack.c.b16 %v106, %v105
    %v119 = vpack.c.b16 %v108, %v107
    %v120 = vpack.c.b16 %v110, %v109
    %v121 = vpack.c.b16 %v112, %v111
    %v122 = vpack.c.b16 %v114, %v113
    %131 = vmatprep.subr.bf16.mxu0 0
    %132 = vmatpush1.bf16.msra.mxu0 %v115
    %133 = vmatprep.subr.bf16.mxu0 0
    %134 = vmatpush1.bf16.msra.mxu0 %v116
    %135 = vmatprep.subr.bf16.mxu0 0
    %136 = vmatpush1.bf16.msra.mxu0 %v117
    %137 = vmatprep.subr.bf16.mxu0 0
    %138 = vmatpush1.bf16.msra.mxu0 %v118
    %139 = vmatprep.subr.bf16.mxu0 0
    %140 = vmatpush1.bf16.msra.mxu0 %v119
    %141 = vmatprep.subr.bf16.mxu0 0
    %142 = vmatpush1.bf16.msra.mxu0 %v120
    %143 = vmatprep.subr.bf16.mxu0 0
    %144 = vmatpush1.bf16.msra.mxu0 %v121
    %145 = vmatprep.subr.bf16.mxu0 0
    %146 = vmatpush1.bf16.msra.mxu0 %v122
    %147 = vmatprep.subr.bf16.mxu0 0
    %148 = vmatpush1.bf16.msra.mxu0 0
    %149 = vmatprep.subr.bf16.mxu0 0
    %150 = vmatpush1.bf16.msra.mxu0 0
    %151 = vmatprep.subr.bf16.mxu0 0
    %152 = vmatpush1.bf16.msra.mxu0 0
    %153 = vmatprep.subr.bf16.mxu0 0
    %154 = vmatpush1.bf16.msra.mxu0 0
    %155 = vmatprep.subr.bf16.mxu0 0
    %156 = vmatpush1.bf16.msra.mxu0 0
    %157 = vmatprep.subr.bf16.mxu0 0
    %158 = vmatpush1.bf16.msra.mxu0 0
    %159 = vmatprep.subr.bf16.mxu0 0
    %160 = vmatpush1.bf16.msra.mxu0 0
    %161 = vmatprep.subr.bf16.mxu0 0
    %162 = vmatpush1.bf16.msra.mxu0 0
    %163 = vmatprep.mubr.bf16.mxu0 0
    %164 = vmatmul.mubr.bf16.gmra.mrb[0].mxu0 %v81
    %v165 = vpop.f32.mrb[0].mxu0
    %v166 = vadd.f32 0.0, %v165
    %v167 = vpop.f32.mrb[0].mxu0
    %v168 = vpop.f32.mrb[0].mxu0
    %v169 = vadd.f32 0.0, %v168
    %v170 = vpop.f32.mrb[0].mxu0
    %171 = vdwg.mxu0
    %v172 = vadd.f32 %v57, %v166
    %v173 = vadd.f32 %v58, %v169
    %174 = vst [vmem:[#allocation2] sm:$0xff] %v172
    %175 = vst [vmem:[#allocation2 + $0x8] sm:$0xff] %v173
    // Predicated region
    $region26: #{tpu_custom_call.1} parent=1 // pred_check
      %p176 = pneg %p44
    $region27: #{tpu_custom_call.1} parent=1 // pred_check_branch
      %178 = sbr.rel (%p176) target = $region29
    $region28: #{tpu_custom_call.1} parent=1 // pred_region
      %v179 = vld [vmem:[#allocation2] sm:$0xff]
      %v180 = vld [vmem:[#allocation2 + $0x8] sm:$0xff]
      %v181 = vpack.c.bf16 %v180, %v179
      %v183 = vunpack.c.l.b16 %v181
      %v184 = vunpack.c.h.b16 %v181
      %v185 = vpack.c.b16 %v183, %v183
      %v186 = vpack.c.b16 %v184, %v184
      %189 = vst [vmem:[#allocation8] sm:$0xf] %v185
      %190 = vst [vmem:[#allocation8 + $0x4] sm:$0xf] %v186
    $region29: #{tpu_custom_call.1} parent=1 // pred_fallthru
      _
    // Predicated region
    $region30: #{tpu_custom_call.1} parent=1 // pred_check
      _
    $region31: #{tpu_custom_call.1} parent=1 // pred_check_branch
      %192 = sbr.rel (0) target = $region33
    $region32: #{tpu_custom_call.1} parent=1 // pred_region
      %s194 = ssub.s32 128, 128
      %195 = vsyncadd [#allocation5], %s194
      %s196 = sshll.u32 [#allocation8], 4
      %s197 = int_to_ptr.vmem [resolvable:$true] %s196
      %202 = dma.vmem_to_hbm [thread:$0]  %s197, 128, %s3, [#allocation5], 64, 64, 4
    $region33: #{tpu_custom_call.1} parent=1 // pred_fallthru
      _
    // Predicated region
    $region34: #{tpu_custom_call.1} parent=1 // pred_check
      _
    $region35: #{tpu_custom_call.1} parent=1 // pred_check_branch
      %204 = sbr.rel (0) target = $region37
    $region36: #{tpu_custom_call.1} parent=1 // pred_region
      %205 = dma.done [#allocation5], 128
    $region37: #{tpu_custom_call.1} parent=1 // pred_fallthru
      _
    %206 = vsyncpa [#allocation4], 1
    %207 = vsyncpa [#allocation7], 1
    %208 = vsyncpa [#allocation5], 1

</llo_original>
